<compile_context>
chip_gen: v5e
topology: v5e:2x2
jax: 0.10.0
libtpu: 0.0.40
codegen_flags: <defaults>
</compile_context>

<pallas_src>
import functools

import jax
import jax.numpy as jnp
from jax import lax
from jax.experimental import pallas as pl
from jax.experimental.pallas import tpu as pltpu


# ----------------------------------------------------------------------------
# Shared per-step math: one interleaved fwd/bwd LSTM step on the fused state.
# ----------------------------------------------------------------------------
def _fused_lstm_step(xin, h, c, w_hh_bf16, hidden):
    """xin: (B, 8H) f32 projected input+bias; h, c: (B, 2H) f32 fused state."""
    H2 = 2 * hidden
    # Single 256-lane block-diagonal recurrent matmul for both directions.
    gates = xin + jnp.dot(h.astype(jnp.bfloat16), w_hh_bf16,
                          preferred_element_type=jnp.float32)
    i_g = jax.nn.sigmoid(gates[:, 0 * H2:1 * H2])   # [i_f | i_b]
    f_g = jax.nn.sigmoid(gates[:, 1 * H2:2 * H2])   # [f_f | f_b]
    g_g = jnp.tanh(gates[:, 2 * H2:3 * H2])         # [g_f | g_b]
    o_g = jax.nn.sigmoid(gates[:, 3 * H2:4 * H2])   # [o_f | o_b]
    c_new = f_g * c + i_g * g_g
    h_new = o_g * jnp.tanh(c_new)
    return h_new, c_new


# ----------------------------------------------------------------------------
# Kernel 1: full-sequence bidirectional LSTM (for lstm_out)
# ----------------------------------------------------------------------------
def _bilstm_seq_kernel(x2d_ref, w_ih_ref, w_hh_ref, b_ref, out_ref, *,
                       seq_len, batch, hidden):
    """Fused bidirectional LSTM, all timesteps.

    x2d_ref  : (S*B, 2E) bf16  rows s*B:(s+1)*B hold [x[s] | x[S-1-s]]
    w_ih_ref : (2E, 8H)  bf16  block-diagonal fused input weights,
                               gate-major / direction-minor columns
                               [i_f i_b f_f f_b g_f g_b o_f o_b]
    w_hh_ref : (2H, 8H)  bf16  block-diagonal fused recurrent weights
    b_ref    : (1, 8H)   f32   b_ih + b_hh, fused column layout
    out_ref  : (S, B, 2H) f32  row s = [h_fwd(t=s) | h_bwd(t=S-1-s)]
    """
    S, B, H = seq_len, batch, hidden

    # Hoisted input projection for all steps & both directions (one matmul,
    # bias folded in).  Stays off the serial recurrence.
    proj = (jnp.dot(x2d_ref[...], w_ih_ref[...],
                    preferred_element_type=jnp.float32) + b_ref[...])

    w_hh = w_hh_ref[...]                         # resident across the loop
    h = jnp.zeros((B, 2 * H), jnp.float32)       # [h_fwd | h_bwd]
    c = jnp.zeros((B, 2 * H), jnp.float32)       # [c_fwd | c_bwd]

    for s in range(S):                           # fully unrolled, static idx
        h, c = _fused_lstm_step(proj[s * B:(s + 1) * B, :], h, c, w_hh, H)
        out_ref[s, :, :] = h                     # one fused, unsliced store


# ----------------------------------------------------------------------------
# Kernel 2: last-timestep-only variant (for forward() == lstm_out[-1])
# ----------------------------------------------------------------------------
def _bilstm_last_kernel(x2d_ref, w_ih_ref, w_hh_ref, b_ref, out_ref, *,
                        seq_len, batch, hidden):
    """Same recurrence; emits only lstm_out[-1] = [h_fwd(t=S-1) | h_bwd(t=S-1)].

    out_ref : (B, 2H) f32
    """
    S, B, H = seq_len, batch, hidden

    proj = (jnp.dot(x2d_ref[...], w_ih_ref[...],
                    preferred_element_type=jnp.float32) + b_ref[...])

    w_hh = w_hh_ref[...]
    h = jnp.zeros((B, 2 * H), jnp.float32)
    c = jnp.zeros((B, 2 * H), jnp.float32)

    for s in range(S):
        h, c = _fused_lstm_step(proj[s * B:(s + 1) * B, :], h, c, w_hh, H)
        if s == 0:
            # Backward direction's hidden for time S-1 is produced at step 0.
            out_ref[:, H:] = h[:, H:]
        if s == S - 1:
            # Forward direction's hidden for time S-1 is produced at the end.
            out_ref[:, :H] = h[:, :H]


# ----------------------------------------------------------------------------
# pallas_call wrappers (layout plumbing lives here, not in the kernels)
# ----------------------------------------------------------------------------
def _pack_x(x, batch_pad):
    """(S, B, E) f32 -> (S*Bp, 2E) bf16 with rows [x[s] | x[S-1-s]], B padded."""
    S, B, E = x.shape
    x_cat = jnp.concatenate([x, x[::-1]], axis=-1)             # (S, B, 2E)
    if batch_pad != B:
        x_cat = jnp.pad(x_cat, ((0, 0), (0, batch_pad - B), (0, 0)))
    return x_cat.reshape(S * batch_pad, 2 * E).astype(jnp.bfloat16)


def _vmem_spec():
    return pl.BlockSpec(memory_space=pltpu.MemorySpace.VMEM)


def bilstm_seq_pallas(x, w_ih_big, w_hh_big, b_big, hidden):
    """x: (S, B, E) f32 -> (S, B, 2H) f32 kernel-layout output where
    [..., :H] is fwd h at time s and [..., H:] is bwd h at time S-1-s."""
    S, B, _ = x.shape
    Bp = ((B + 7) // 8) * 8                      # sublane-aligned batch
    x2d = _pack_x(x, Bp)
    kernel = functools.partial(_bilstm_seq_kernel,
                               seq_len=S, batch=Bp, hidden=hidden)
    out = pl.pallas_call(
        kernel,
        out_shape=jax.ShapeDtypeStruct((S, Bp, 2 * hidden), jnp.float32),
        in_specs=[_vmem_spec() for _ in range(4)],
        out_specs=_vmem_spec(),
    )(x2d, w_ih_big, w_hh_big, b_big)
    return out[:, :B, :]


def bilstm_last_pallas(x, w_ih_big, w_hh_big, b_big, hidden):
    """x: (S, B, E) f32 -> (B, 2H) f32 == lstm_out[-1]."""
    S, B, _ = x.shape
    Bp = ((B + 7) // 8) * 8
    x2d = _pack_x(x, Bp)
    kernel = functools.partial(_bilstm_last_kernel,
                               seq_len=S, batch=Bp, hidden=hidden)
    out = pl.pallas_call(
        kernel,
        out_shape=jax.ShapeDtypeStruct((Bp, 2 * hidden), jnp.float32),
        in_specs=[_vmem_spec() for _ in range(4)],
        out_specs=_vmem_spec(),
    )(x2d, w_ih_big, w_hh_big, b_big)
    return out[:B, :]


# ----------------------------------------------------------------------------
# Model: parameter setup mirroring nn.LSTM(bidirectional=True)
# ----------------------------------------------------------------------------
class Inference:
    """JAX/Pallas port of `inference`: forward(sentence) -> lstm_out[-1]."""

    def __init__(self, embedding_dim, hidden_dim, vocab_size, label_size,
                 use_gpu, batch_size, dropout=0.5, *, key):
        self.embedding_dim = embedding_dim
        self.hidden_dim = hidden_dim
        self.use_gpu = use_gpu
        self.batch_size = batch_size
        self.dropout = dropout          # unused by the original forward
        self.vocab_size = vocab_size    # unused by the original forward
        self.label_size = label_size    # unused by the original forward

        H, E = hidden_dim, embedding_dim
        bound = 1.0 / float(H) ** 0.5
        keys = jax.random.split(key, 8)

        def u(k, shape):
            return jax.random.uniform(k, shape, jnp.float32, -bound, bound)

        # PyTorch nn.LSTM per-direction parameters, gate order [i, f, g, o].
        self.w_ih = (u(keys[0], (4 * H, E)), u(keys[1], (4 * H, E)))  # fwd, bwd
        self.w_hh = (u(keys[2], (4 * H, H)), u(keys[3], (4 * H, H)))
        self.b_ih = (u(keys[4], (4 * H,)), u(keys[5], (4 * H,)))
        self.b_hh = (u(keys[6], (4 * H,)), u(keys[7], (4 * H,)))

        # ---- pack into fused gate-major / direction-minor layouts ----------
        def per_gate(w_t):              # (X, 4H) -> (X, 4, H)
            return w_t.reshape(w_t.shape[0], 4, H)

        # Input weights: block-diagonal over direction -> (2E, 8H).  Paired
        # with wrapper-side concat([x, x[::-1]], -1), this removes the per-step
        # fwd/bwd select from the kernel's serial chain.
        zE = jnp.zeros((E, 4, H), jnp.float32)
        top_ih = jnp.stack([per_gate(self.w_ih[0].T), zE], axis=2).reshape(E, 8 * H)
        bot_ih = jnp.stack([zE, per_gate(self.w_ih[1].T)], axis=2).reshape(E, 8 * H)
        self.w_ih_big = jnp.concatenate([top_ih, bot_ih], axis=0).astype(jnp.bfloat16)

        # Recurrent weights: block-diagonal over direction -> (2H, 8H).
        zH = jnp.zeros((H, 4, H), jnp.float32)
        top_hh = jnp.stack([per_gate(self.w_hh[0].T), zH], axis=2).reshape(H, 8 * H)
        bot_hh = jnp.stack([zH, per_gate(self.w_hh[1].T)], axis=2).reshape(H, 8 * H)
        self.w_hh_big = jnp.concatenate([top_hh, bot_hh], axis=0).astype(jnp.bfloat16)

        # Fused bias (kept f32; it is added to the f32 accumulator).
        bf = (self.b_ih[0] + self.b_hh[0]).reshape(4, H)
        bb = (self.b_ih[1] + self.b_hh[1]).reshape(4, H)
        self.b_big = jnp.stack([bf, bb], axis=1).reshape(1, 8 * H)

        self.hidden = self.init_hidden()

    def init_hidden(self):
        shape = (2, self.batch_size, self.hidden_dim)
        return (jnp.zeros(shape, jnp.float32), jnp.zeros(shape, jnp.float32))

    def lstm_out(self, sentence):
        H = self.hidden_dim
        out = bilstm_seq_pallas(sentence, self.w_ih_big, self.w_hh_big,
                                self.b_big, H)
        # Backward half is stored at its processing step; time-reverse here.
        return jnp.concatenate([out[:, :, :H], out[::-1, :, H:]], axis=-1)

    def forward(self, sentence):
        # self.hidden is always zeros; the kernel zero-inits (h, c) internally.
        return bilstm_last_pallas(sentence, self.w_ih_big, self.w_hh_big,
                                  self.b_big, self.hidden_dim)


# ----------------------------------------------------------------------------
# Pure-JAX f32 reference (for correctness check)
# ----------------------------------------------------------------------------
def _reference_bilstm(x, w_ih, w_hh, b_ih, b_hh, H):
    hi = lax.Precision.HIGHEST

    def run_dir(xs, wi, wh, bi, bh):
        B = xs.shape[1]

        def step(carry, x_t):
            h, c = carry
            g = (jnp.dot(x_t, wi.T, precision=hi)
                 + jnp.dot(h, wh.T, precision=hi) + bi + bh)
            i = jax.nn.sigmoid(g[:, 0 * H:1 * H])
            f = jax.nn.sigmoid(g[:, 1 * H:2 * H])
            gg = jnp.tanh(g[:, 2 * H:3 * H])
            o = jax.nn.sigmoid(g[:, 3 * H:4 * H])
            c = f * c + i * gg
            h = o * jnp.tanh(c)
            return (h, c), h

        init = (jnp.zeros((B, H), jnp.float32), jnp.zeros((B, H), jnp.float32))
        _, hs = lax.scan(step, init, xs)
        return hs

    hs_f = run_dir(x, w_ih[0], w_hh[0], b_ih[0], b_hh[0])
    hs_b = run_dir(x[::-1], w_ih[1], w_hh[1], b_ih[1], b_hh[1])[::-1]
    return jnp.concatenate([hs_f, hs_b], axis=-1)                 # (S, B, 2H)


# ----------------------------------------------------------------------------
if __name__ == "__main__":
    EMBEDDING_DIM = 16
    HIDDEN_DIM = 32
    VOCAB_SIZE = 50
    LABEL_SIZE = 3
    BATCH = 2
    SEQ = 8

    key = jax.random.PRNGKey(0)
    k_model, k_x = jax.random.split(key)

    model = Inference(EMBEDDING_DIM, HIDDEN_DIM, VOCAB_SIZE, LABEL_SIZE,
                      use_gpu=False, batch_size=BATCH, key=k_model)

    # `sentence` is the time-major (S, B, E) float input nn.LSTM consumes.
    sentence = jax.random.normal(k_x, (SEQ, BATCH, EMBEDDING_DIM), jnp.float32)

    out_last = jax.block_until_ready(model.forward(sentence))     # (B, 2H)
    full = jax.block_until_ready(model.lstm_out(sentence))        # (S, B, 2H)

    assert out_last.shape == (BATCH, 2 * HIDDEN_DIM)
    assert full.shape == (SEQ, BATCH, 2 * HIDDEN_DIM)
    assert bool(jnp.all(jnp.isfinite(out_last)))
    assert bool(jnp.all(jnp.isfinite(full)))

    # Last-only kernel must agree with the full-sequence kernel's last step.
    assert bool(jnp.allclose(out_last, full[-1], atol=1e-4, rtol=1e-4))

    # Compare against the f32 reference (tolerance loosened for the bf16 MXU
    # operands; elementwise math and accumulation remain f32).
    ref_full = _reference_bilstm(sentence, model.w_ih, model.w_hh,
                                 model.b_ih, model.b_hh, HIDDEN_DIM)
    assert bool(jnp.allclose(full, ref_full, atol=5e-2, rtol=5e-2))
    assert bool(jnp.allclose(out_last, ref_full[-1], atol=5e-2, rtol=5e-2))

    print("KERNEL_OK")
</pallas_src>

<mosaic_0001>
module attributes {stable_mosaic.version = 11 : i64} {
  func.func @_bilstm_last_kernel(%arg0: memref<64x32xbf16, #tpu.memory_space<vmem>>, %arg1: memref<32x256xbf16, #tpu.memory_space<vmem>>, %arg2: memref<64x256xbf16, #tpu.memory_space<vmem>>, %arg3: memref<1x256xf32, #tpu.memory_space<vmem>>, %arg4: memref<8x64xf32, #tpu.memory_space<vmem>>) attributes {dimension_semantics = [], scalar_prefetch = 0 : i64, scratch_operands = 0 : i64, tpu.core_type = #tpu.core_type<tc>} {
    %c0 = arith.constant 0 : index
    %c0_0 = arith.constant 0 : index
    %0 = vector.load %arg0[%c0, %c0_0] : memref<64x32xbf16, #tpu.memory_space<vmem>>, vector<64x32xbf16>
    %c0_1 = arith.constant 0 : index
    %c0_2 = arith.constant 0 : index
    %1 = vector.load %arg1[%c0_1, %c0_2] : memref<32x256xbf16, #tpu.memory_space<vmem>>, vector<32x256xbf16>
    %cst = arith.constant dense<0.000000e+00> : vector<64x256xf32>
    %2 = tpu.matmul %0, %1, %cst {dimension_numbers = #tpu.dot_dimension_numbers<[1], [0], [0], [1], [0, 0, 1, 1], [], []>} : vector<64x32xbf16>, vector<32x256xbf16>, vector<64x256xf32> -> vector<64x256xf32>
    %c0_3 = arith.constant 0 : index
    %c0_4 = arith.constant 0 : index
    %3 = vector.load %arg3[%c0_3, %c0_4] : memref<1x256xf32, #tpu.memory_space<vmem>>, vector<1x256xf32>
    %4 = vector.broadcast %3 : vector<1x256xf32> to vector<64x256xf32>
    %5 = arith.addf %2, %4 : vector<64x256xf32>
    %c0_5 = arith.constant 0 : index
    %c0_6 = arith.constant 0 : index
    %6 = vector.load %arg2[%c0_5, %c0_6] : memref<64x256xbf16, #tpu.memory_space<vmem>>, vector<64x256xbf16>
    %cst_7 = arith.constant 0.000000e+00 : f32
    %7 = vector.broadcast %cst_7 : f32 to vector<8x64xf32>
    %cst_8 = arith.constant 0.000000e+00 : f32
    %8 = vector.broadcast %cst_8 : f32 to vector<8x64xf32>
    %9 = vector.extract_strided_slice %5 {offsets = [0, 0], sizes = [8, 256], strides = [1, 1]} : vector<64x256xf32> to vector<8x256xf32>
    %10 = arith.truncf %7 : vector<8x64xf32> to vector<8x64xbf16>
    %cst_9 = arith.constant dense<0.000000e+00> : vector<8x256xf32>
    %11 = tpu.matmul %10, %6, %cst_9 {dimension_numbers = #tpu.dot_dimension_numbers<[1], [0], [0], [1], [0, 0, 1, 1], [], []>} : vector<8x64xbf16>, vector<64x256xbf16>, vector<8x256xf32> -> vector<8x256xf32>
    %12 = arith.addf %9, %11 : vector<8x256xf32>
    %13 = vector.extract_strided_slice %12 {offsets = [0, 0], sizes = [8, 64], strides = [1, 1]} : vector<8x256xf32> to vector<8x64xf32>
    %14 = arith.negf %13 : vector<8x64xf32>
    %15 = math.exp %14 : vector<8x64xf32>
    %cst_10 = arith.constant 1.000000e+00 : f32
    %16 = vector.broadcast %cst_10 : f32 to vector<8x64xf32>
    %17 = arith.addf %16, %15 : vector<8x64xf32>
    %18 = arith.divf %16, %17 : vector<8x64xf32>
    %19 = vector.extract_strided_slice %12 {offsets = [0, 64], sizes = [8, 64], strides = [1, 1]} : vector<8x256xf32> to vector<8x64xf32>
    %20 = arith.negf %19 : vector<8x64xf32>
    %21 = math.exp %20 : vector<8x64xf32>
    %cst_11 = arith.constant 1.000000e+00 : f32
    %22 = vector.broadcast %cst_11 : f32 to vector<8x64xf32>
    %23 = arith.addf %22, %21 : vector<8x64xf32>
    %24 = arith.divf %22, %23 : vector<8x64xf32>
    %25 = vector.extract_strided_slice %12 {offsets = [0, 128], sizes = [8, 64], strides = [1, 1]} : vector<8x256xf32> to vector<8x64xf32>
    %26 = math.tanh %25 : vector<8x64xf32>
    %27 = vector.extract_strided_slice %12 {offsets = [0, 192], sizes = [8, 64], strides = [1, 1]} : vector<8x256xf32> to vector<8x64xf32>
    %28 = arith.negf %27 : vector<8x64xf32>
    %29 = math.exp %28 : vector<8x64xf32>
    %cst_12 = arith.constant 1.000000e+00 : f32
    %30 = vector.broadcast %cst_12 : f32 to vector<8x64xf32>
    %31 = arith.addf %30, %29 : vector<8x64xf32>
    %32 = arith.divf %30, %31 : vector<8x64xf32>
    %33 = arith.mulf %24, %8 : vector<8x64xf32>
    %34 = arith.mulf %18, %26 : vector<8x64xf32>
    %35 = arith.addf %33, %34 : vector<8x64xf32>
    %36 = math.tanh %35 : vector<8x64xf32>
    %37 = arith.mulf %32, %36 : vector<8x64xf32>
    %38 = vector.extract_strided_slice %37 {offsets = [0, 32], sizes = [8, 32], strides = [1, 1]} : vector<8x64xf32> to vector<8x32xf32>
    %c0_13 = arith.constant 0 : index
    %c32 = arith.constant 32 : index
    %39 = vector.load %arg4[%c0_13, %c32] : memref<8x64xf32, #tpu.memory_space<vmem>>, vector<8x32xf32>
    tpu.vector_store %arg4[%c0_13, %c32], %38 {strides = array<i32>} : memref<8x64xf32, #tpu.memory_space<vmem>>, vector<8x32xf32>,
    %40 = vector.extract_strided_slice %5 {offsets = [8, 0], sizes = [8, 256], strides = [1, 1]} : vector<64x256xf32> to vector<8x256xf32>
    %41 = arith.truncf %37 : vector<8x64xf32> to vector<8x64xbf16>
    %cst_14 = arith.constant dense<0.000000e+00> : vector<8x256xf32>
    %42 = tpu.matmul %41, %6, %cst_14 {dimension_numbers = #tpu.dot_dimension_numbers<[1], [0], [0], [1], [0, 0, 1, 1], [], []>} : vector<8x64xbf16>, vector<64x256xbf16>, vector<8x256xf32> -> vector<8x256xf32>
    %43 = arith.addf %40, %42 : vector<8x256xf32>
    %44 = vector.extract_strided_slice %43 {offsets = [0, 0], sizes = [8, 64], strides = [1, 1]} : vector<8x256xf32> to vector<8x64xf32>
    %45 = arith.negf %44 : vector<8x64xf32>
    %46 = math.exp %45 : vector<8x64xf32>
    %cst_15 = arith.constant 1.000000e+00 : f32
    %47 = vector.broadcast %cst_15 : f32 to vector<8x64xf32>
    %48 = arith.addf %47, %46 : vector<8x64xf32>
    %49 = arith.divf %47, %48 : vector<8x64xf32>
    %50 = vector.extract_strided_slice %43 {offsets = [0, 64], sizes = [8, 64], strides = [1, 1]} : vector<8x256xf32> to vector<8x64xf32>
    %51 = arith.negf %50 : vector<8x64xf32>
    %52 = math.exp %51 : vector<8x64xf32>
    %cst_16 = arith.constant 1.000000e+00 : f32
    %53 = vector.broadcast %cst_16 : f32 to vector<8x64xf32>
    %54 = arith.addf %53, %52 : vector<8x64xf32>
    %55 = arith.divf %53, %54 : vector<8x64xf32>
    %56 = vector.extract_strided_slice %43 {offsets = [0, 128], sizes = [8, 64], strides = [1, 1]} : vector<8x256xf32> to vector<8x64xf32>
    %57 = math.tanh %56 : vector<8x64xf32>
    %58 = vector.extract_strided_slice %43 {offsets = [0, 192], sizes = [8, 64], strides = [1, 1]} : vector<8x256xf32> to vector<8x64xf32>
    %59 = arith.negf %58 : vector<8x64xf32>
    %60 = math.exp %59 : vector<8x64xf32>
    %cst_17 = arith.constant 1.000000e+00 : f32
    %61 = vector.broadcast %cst_17 : f32 to vector<8x64xf32>
    %62 = arith.addf %61, %60 : vector<8x64xf32>
    %63 = arith.divf %61, %62 : vector<8x64xf32>
    %64 = arith.mulf %55, %35 : vector<8x64xf32>
    %65 = arith.mulf %49, %57 : vector<8x64xf32>
    %66 = arith.addf %64, %65 : vector<8x64xf32>
    %67 = math.tanh %66 : vector<8x64xf32>
    %68 = arith.mulf %63, %67 : vector<8x64xf32>
    %69 = vector.extract_strided_slice %5 {offsets = [16, 0], sizes = [8, 256], strides = [1, 1]} : vector<64x256xf32> to vector<8x256xf32>
    %70 = arith.truncf %68 : vector<8x64xf32> to vector<8x64xbf16>
    %cst_18 = arith.constant dense<0.000000e+00> : vector<8x256xf32>
    %71 = tpu.matmul %70, %6, %cst_18 {dimension_numbers = #tpu.dot_dimension_numbers<[1], [0], [0], [1], [0, 0, 1, 1], [], []>} : vector<8x64xbf16>, vector<64x256xbf16>, vector<8x256xf32> -> vector<8x256xf32>
    %72 = arith.addf %69, %71 : vector<8x256xf32>
    %73 = vector.extract_strided_slice %72 {offsets = [0, 0], sizes = [8, 64], strides = [1, 1]} : vector<8x256xf32> to vector<8x64xf32>
    %74 = arith.negf %73 : vector<8x64xf32>
    %75 = math.exp %74 : vector<8x64xf32>
    %cst_19 = arith.constant 1.000000e+00 : f32
    %76 = vector.broadcast %cst_19 : f32 to vector<8x64xf32>
    %77 = arith.addf %76, %75 : vector<8x64xf32>
    %78 = arith.divf %76, %77 : vector<8x64xf32>
    %79 = vector.extract_strided_slice %72 {offsets = [0, 64], sizes = [8, 64], strides = [1, 1]} : vector<8x256xf32> to vector<8x64xf32>
    %80 = arith.negf %79 : vector<8x64xf32>
    %81 = math.exp %80 : vector<8x64xf32>
    %cst_20 = arith.constant 1.000000e+00 : f32
    %82 = vector.broadcast %cst_20 : f32 to vector<8x64xf32>
    %83 = arith.addf %82, %81 : vector<8x64xf32>
    %84 = arith.divf %82, %83 : vector<8x64xf32>
    %85 = vector.extract_strided_slice %72 {offsets = [0, 128], sizes = [8, 64], strides = [1, 1]} : vector<8x256xf32> to vector<8x64xf32>
    %86 = math.tanh %85 : vector<8x64xf32>
    %87 = vector.extract_strided_slice %72 {offsets = [0, 192], sizes = [8, 64], strides = [1, 1]} : vector<8x256xf32> to vector<8x64xf32>
    %88 = arith.negf %87 : vector<8x64xf32>
    %89 = math.exp %88 : vector<8x64xf32>
    %cst_21 = arith.constant 1.000000e+00 : f32
    %90 = vector.broadcast %cst_21 : f32 to vector<8x64xf32>
    %91 = arith.addf %90, %89 : vector<8x64xf32>
    %92 = arith.divf %90, %91 : vector<8x64xf32>
    %93 = arith.mulf %84, %66 : vector<8x64xf32>
    %94 = arith.mulf %78, %86 : vector<8x64xf32>
    %95 = arith.addf %93, %94 : vector<8x64xf32>
    %96 = math.tanh %95 : vector<8x64xf32>
    %97 = arith.mulf %92, %96 : vector<8x64xf32>
    %98 = vector.extract_strided_slice %5 {offsets = [24, 0], sizes = [8, 256], strides = [1, 1]} : vector<64x256xf32> to vector<8x256xf32>
    %99 = arith.truncf %97 : vector<8x64xf32> to vector<8x64xbf16>
    %cst_22 = arith.constant dense<0.000000e+00> : vector<8x256xf32>
    %100 = tpu.matmul %99, %6, %cst_22 {dimension_numbers = #tpu.dot_dimension_numbers<[1], [0], [0], [1], [0, 0, 1, 1], [], []>} : vector<8x64xbf16>, vector<64x256xbf16>, vector<8x256xf32> -> vector<8x256xf32>
    %101 = arith.addf %98, %100 : vector<8x256xf32>
    %102 = vector.extract_strided_slice %101 {offsets = [0, 0], sizes = [8, 64], strides = [1, 1]} : vector<8x256xf32> to vector<8x64xf32>
    %103 = arith.negf %102 : vector<8x64xf32>
    %104 = math.exp %103 : vector<8x64xf32>
    %cst_23 = arith.constant 1.000000e+00 : f32
    %105 = vector.broadcast %cst_23 : f32 to vector<8x64xf32>
    %106 = arith.addf %105, %104 : vector<8x64xf32>
    %107 = arith.divf %105, %106 : vector<8x64xf32>
    %108 = vector.extract_strided_slice %101 {offsets = [0, 64], sizes = [8, 64], strides = [1, 1]} : vector<8x256xf32> to vector<8x64xf32>
    %109 = arith.negf %108 : vector<8x64xf32>
    %110 = math.exp %109 : vector<8x64xf32>
    %cst_24 = arith.constant 1.000000e+00 : f32
    %111 = vector.broadcast %cst_24 : f32 to vector<8x64xf32>
    %112 = arith.addf %111, %110 : vector<8x64xf32>
    %113 = arith.divf %111, %112 : vector<8x64xf32>
    %114 = vector.extract_strided_slice %101 {offsets = [0, 128], sizes = [8, 64], strides = [1, 1]} : vector<8x256xf32> to vector<8x64xf32>
    %115 = math.tanh %114 : vector<8x64xf32>
    %116 = vector.extract_strided_slice %101 {offsets = [0, 192], sizes = [8, 64], strides = [1, 1]} : vector<8x256xf32> to vector<8x64xf32>
    %117 = arith.negf %116 : vector<8x64xf32>
    %118 = math.exp %117 : vector<8x64xf32>
    %cst_25 = arith.constant 1.000000e+00 : f32
    %119 = vector.broadcast %cst_25 : f32 to vector<8x64xf32>
    %120 = arith.addf %119, %118 : vector<8x64xf32>
    %121 = arith.divf %119, %120 : vector<8x64xf32>
    %122 = arith.mulf %113, %95 : vector<8x64xf32>
    %123 = arith.mulf %107, %115 : vector<8x64xf32>
    %124 = arith.addf %122, %123 : vector<8x64xf32>
    %125 = math.tanh %124 : vector<8x64xf32>
    %126 = arith.mulf %121, %125 : vector<8x64xf32>
    %127 = vector.extract_strided_slice %5 {offsets = [32, 0], sizes = [8, 256], strides = [1, 1]} : vector<64x256xf32> to vector<8x256xf32>
    %128 = arith.truncf %126 : vector<8x64xf32> to vector<8x64xbf16>
    %cst_26 = arith.constant dense<0.000000e+00> : vector<8x256xf32>
    %129 = tpu.matmul %128, %6, %cst_26 {dimension_numbers = #tpu.dot_dimension_numbers<[1], [0], [0], [1], [0, 0, 1, 1], [], []>} : vector<8x64xbf16>, vector<64x256xbf16>, vector<8x256xf32> -> vector<8x256xf32>
    %130 = arith.addf %127, %129 : vector<8x256xf32>
    %131 = vector.extract_strided_slice %130 {offsets = [0, 0], sizes = [8, 64], strides = [1, 1]} : vector<8x256xf32> to vector<8x64xf32>
    %132 = arith.negf %131 : vector<8x64xf32>
    %133 = math.exp %132 : vector<8x64xf32>
    %cst_27 = arith.constant 1.000000e+00 : f32
    %134 = vector.broadcast %cst_27 : f32 to vector<8x64xf32>
    %135 = arith.addf %134, %133 : vector<8x64xf32>
    %136 = arith.divf %134, %135 : vector<8x64xf32>
    %137 = vector.extract_strided_slice %130 {offsets = [0, 64], sizes = [8, 64], strides = [1, 1]} : vector<8x256xf32> to vector<8x64xf32>
    %138 = arith.negf %137 : vector<8x64xf32>
    %139 = math.exp %138 : vector<8x64xf32>
    %cst_28 = arith.constant 1.000000e+00 : f32
    %140 = vector.broadcast %cst_28 : f32 to vector<8x64xf32>
    %141 = arith.addf %140, %139 : vector<8x64xf32>
    %142 = arith.divf %140, %141 : vector<8x64xf32>
    %143 = vector.extract_strided_slice %130 {offsets = [0, 128], sizes = [8, 64], strides = [1, 1]} : vector<8x256xf32> to vector<8x64xf32>
    %144 = math.tanh %143 : vector<8x64xf32>
    %145 = vector.extract_strided_slice %130 {offsets = [0, 192], sizes = [8, 64], strides = [1, 1]} : vector<8x256xf32> to vector<8x64xf32>
    %146 = arith.negf %145 : vector<8x64xf32>
    %147 = math.exp %146 : vector<8x64xf32>
    %cst_29 = arith.constant 1.000000e+00 : f32
    %148 = vector.broadcast %cst_29 : f32 to vector<8x64xf32>
    %149 = arith.addf %148, %147 : vector<8x64xf32>
    %150 = arith.divf %148, %149 : vector<8x64xf32>
    %151 = arith.mulf %142, %124 : vector<8x64xf32>
    %152 = arith.mulf %136, %144 : vector<8x64xf32>
    %153 = arith.addf %151, %152 : vector<8x64xf32>
    %154 = math.tanh %153 : vector<8x64xf32>
    %155 = arith.mulf %150, %154 : vector<8x64xf32>
    %156 = vector.extract_strided_slice %5 {offsets = [40, 0], sizes = [8, 256], strides = [1, 1]} : vector<64x256xf32> to vector<8x256xf32>
    %157 = arith.truncf %155 : vector<8x64xf32> to vector<8x64xbf16>
    %cst_30 = arith.constant dense<0.000000e+00> : vector<8x256xf32>
    %158 = tpu.matmul %157, %6, %cst_30 {dimension_numbers = #tpu.dot_dimension_numbers<[1], [0], [0], [1], [0, 0, 1, 1], [], []>} : vector<8x64xbf16>, vector<64x256xbf16>, vector<8x256xf32> -> vector<8x256xf32>
    %159 = arith.addf %156, %158 : vector<8x256xf32>
    %160 = vector.extract_strided_slice %159 {offsets = [0, 0], sizes = [8, 64], strides = [1, 1]} : vector<8x256xf32> to vector<8x64xf32>
    %161 = arith.negf %160 : vector<8x64xf32>
    %162 = math.exp %161 : vector<8x64xf32>
    %cst_31 = arith.constant 1.000000e+00 : f32
    %163 = vector.broadcast %cst_31 : f32 to vector<8x64xf32>
    %164 = arith.addf %163, %162 : vector<8x64xf32>
    %165 = arith.divf %163, %164 : vector<8x64xf32>
    %166 = vector.extract_strided_slice %159 {offsets = [0, 64], sizes = [8, 64], strides = [1, 1]} : vector<8x256xf32> to vector<8x64xf32>
    %167 = arith.negf %166 : vector<8x64xf32>
    %168 = math.exp %167 : vector<8x64xf32>
    %cst_32 = arith.constant 1.000000e+00 : f32
    %169 = vector.broadcast %cst_32 : f32 to vector<8x64xf32>
    %170 = arith.addf %169, %168 : vector<8x64xf32>
    %171 = arith.divf %169, %170 : vector<8x64xf32>
    %172 = vector.extract_strided_slice %159 {offsets = [0, 128], sizes = [8, 64], strides = [1, 1]} : vector<8x256xf32> to vector<8x64xf32>
    %173 = math.tanh %172 : vector<8x64xf32>
    %174 = vector.extract_strided_slice %159 {offsets = [0, 192], sizes = [8, 64], strides = [1, 1]} : vector<8x256xf32> to vector<8x64xf32>
    %175 = arith.negf %174 : vector<8x64xf32>
    %176 = math.exp %175 : vector<8x64xf32>
    %cst_33 = arith.constant 1.000000e+00 : f32
    %177 = vector.broadcast %cst_33 : f32 to vector<8x64xf32>
    %178 = arith.addf %177, %176 : vector<8x64xf32>
    %179 = arith.divf %177, %178 : vector<8x64xf32>
    %180 = arith.mulf %171, %153 : vector<8x64xf32>
    %181 = arith.mulf %165, %173 : vector<8x64xf32>
    %182 = arith.addf %180, %181 : vector<8x64xf32>
    %183 = math.tanh %182 : vector<8x64xf32>
    %184 = arith.mulf %179, %183 : vector<8x64xf32>
    %185 = vector.extract_strided_slice %5 {offsets = [48, 0], sizes = [8, 256], strides = [1, 1]} : vector<64x256xf32> to vector<8x256xf32>
    %186 = arith.truncf %184 : vector<8x64xf32> to vector<8x64xbf16>
    %cst_34 = arith.constant dense<0.000000e+00> : vector<8x256xf32>
    %187 = tpu.matmul %186, %6, %cst_34 {dimension_numbers = #tpu.dot_dimension_numbers<[1], [0], [0], [1], [0, 0, 1, 1], [], []>} : vector<8x64xbf16>, vector<64x256xbf16>, vector<8x256xf32> -> vector<8x256xf32>
    %188 = arith.addf %185, %187 : vector<8x256xf32>
    %189 = vector.extract_strided_slice %188 {offsets = [0, 0], sizes = [8, 64], strides = [1, 1]} : vector<8x256xf32> to vector<8x64xf32>
    %190 = arith.negf %189 : vector<8x64xf32>
    %191 = math.exp %190 : vector<8x64xf32>
    %cst_35 = arith.constant 1.000000e+00 : f32
    %192 = vector.broadcast %cst_35 : f32 to vector<8x64xf32>
    %193 = arith.addf %192, %191 : vector<8x64xf32>
    %194 = arith.divf %192, %193 : vector<8x64xf32>
    %195 = vector.extract_strided_slice %188 {offsets = [0, 64], sizes = [8, 64], strides = [1, 1]} : vector<8x256xf32> to vector<8x64xf32>
    %196 = arith.negf %195 : vector<8x64xf32>
    %197 = math.exp %196 : vector<8x64xf32>
    %cst_36 = arith.constant 1.000000e+00 : f32
    %198 = vector.broadcast %cst_36 : f32 to vector<8x64xf32>
    %199 = arith.addf %198, %197 : vector<8x64xf32>
    %200 = arith.divf %198, %199 : vector<8x64xf32>
    %201 = vector.extract_strided_slice %188 {offsets = [0, 128], sizes = [8, 64], strides = [1, 1]} : vector<8x256xf32> to vector<8x64xf32>
    %202 = math.tanh %201 : vector<8x64xf32>
    %203 = vector.extract_strided_slice %188 {offsets = [0, 192], sizes = [8, 64], strides = [1, 1]} : vector<8x256xf32> to vector<8x64xf32>
    %204 = arith.negf %203 : vector<8x64xf32>
    %205 = math.exp %204 : vector<8x64xf32>
    %cst_37 = arith.constant 1.000000e+00 : f32
    %206 = vector.broadcast %cst_37 : f32 to vector<8x64xf32>
    %207 = arith.addf %206, %205 : vector<8x64xf32>
    %208 = arith.divf %206, %207 : vector<8x64xf32>
    %209 = arith.mulf %200, %182 : vector<8x64xf32>
    %210 = arith.mulf %194, %202 : vector<8x64xf32>
    %211 = arith.addf %209, %210 : vector<8x64xf32>
    %212 = math.tanh %211 : vector<8x64xf32>
    %213 = arith.mulf %208, %212 : vector<8x64xf32>
    %214 = vector.extract_strided_slice %5 {offsets = [56, 0], sizes = [8, 256], strides = [1, 1]} : vector<64x256xf32> to vector<8x256xf32>
    %215 = arith.truncf %213 : vector<8x64xf32> to vector<8x64xbf16>
    %cst_38 = arith.constant dense<0.000000e+00> : vector<8x256xf32>
    %216 = tpu.matmul %215, %6, %cst_38 {dimension_numbers = #tpu.dot_dimension_numbers<[1], [0], [0], [1], [0, 0, 1, 1], [], []>} : vector<8x64xbf16>, vector<64x256xbf16>, vector<8x256xf32> -> vector<8x256xf32>
    %217 = arith.addf %214, %216 : vector<8x256xf32>
    %218 = vector.extract_strided_slice %217 {offsets = [0, 0], sizes = [8, 64], strides = [1, 1]} : vector<8x256xf32> to vector<8x64xf32>
    %219 = arith.negf %218 : vector<8x64xf32>
    %220 = math.exp %219 : vector<8x64xf32>
    %cst_39 = arith.constant 1.000000e+00 : f32
    %221 = vector.broadcast %cst_39 : f32 to vector<8x64xf32>
    %222 = arith.addf %221, %220 : vector<8x64xf32>
    %223 = arith.divf %221, %222 : vector<8x64xf32>
    %224 = vector.extract_strided_slice %217 {offsets = [0, 64], sizes = [8, 64], strides = [1, 1]} : vector<8x256xf32> to vector<8x64xf32>
    %225 = arith.negf %224 : vector<8x64xf32>
    %226 = math.exp %225 : vector<8x64xf32>
    %cst_40 = arith.constant 1.000000e+00 : f32
    %227 = vector.broadcast %cst_40 : f32 to vector<8x64xf32>
    %228 = arith.addf %227, %226 : vector<8x64xf32>
    %229 = arith.divf %227, %228 : vector<8x64xf32>
    %230 = vector.extract_strided_slice %217 {offsets = [0, 128], sizes = [8, 64], strides = [1, 1]} : vector<8x256xf32> to vector<8x64xf32>
    %231 = math.tanh %230 : vector<8x64xf32>
    %232 = vector.extract_strided_slice %217 {offsets = [0, 192], sizes = [8, 64], strides = [1, 1]} : vector<8x256xf32> to vector<8x64xf32>
    %233 = arith.negf %232 : vector<8x64xf32>
    %234 = math.exp %233 : vector<8x64xf32>
    %cst_41 = arith.constant 1.000000e+00 : f32
    %235 = vector.broadcast %cst_41 : f32 to vector<8x64xf32>
    %236 = arith.addf %235, %234 : vector<8x64xf32>
    %237 = arith.divf %235, %236 : vector<8x64xf32>
    %238 = arith.mulf %229, %211 : vector<8x64xf32>
    %239 = arith.mulf %223, %231 : vector<8x64xf32>
    %240 = arith.addf %238, %239 : vector<8x64xf32>
    %241 = math.tanh %240 : vector<8x64xf32>
    %242 = arith.mulf %237, %241 : vector<8x64xf32>
    %243 = vector.extract_strided_slice %242 {offsets = [0, 0], sizes = [8, 32], strides = [1, 1]} : vector<8x64xf32> to vector<8x32xf32>
    %c0_42 = arith.constant 0 : index
    %c0_43 = arith.constant 0 : index
    %244 = vector.load %arg4[%c0_42, %c0_43] : memref<8x64xf32, #tpu.memory_space<vmem>>, vector<8x32xf32>
    tpu.vector_store %arg4[%c0_42, %c0_43], %243 {strides = array<i32>} : memref<8x64xf32, #tpu.memory_space<vmem>>, vector<8x32xf32>,
    return
  }
}

</mosaic_0001>

<llo_original>
// kernel: tpu_custom_call.1
$region0: #{tpu_custom_call.1}
  #allocation0 [shape = 'u32[]', space=smem, size = 0x4, offset = 0x4, fixed_abs, tag = 'smem constant byte address 0x4 - core index']
  #allocation1 [shape = 'u32[72,128]{1,0:T(1,128)}', space=vmem, size = 0x9000, scoped, tag = 'internal scratch']
  %s0 = inlined_call_operand.vmem [shape: bf16[64,32], index: 0, kind: input, shape index: {}]
  %s1 = inlined_call_operand.vmem [shape: bf16[32,256], index: 1, kind: input, shape index: {}]
  %s2 = inlined_call_operand.hbm [shape: bf16[64,256], index: 2, kind: input, shape index: {}]
  %s3 = inlined_call_operand.vmem [shape: f32[1,256], index: 3, kind: input, shape index: {}]
  %s4 = inlined_call_operand.hbm [shape: f32[8,64], index: 4, kind: output, shape index: {}]
  %s5 = sld [smem:[#allocation0]]
  $region30: #{tpu_custom_call.1} parent=0
    _
  %s7 = ssub.s32 1, %s5
  %s8 = scalar_select 0, %s7, %s5
  $region1: #{tpu_custom_call.1} parent=0
    #allocation2 [shape = 'u8[32768]{0}', space=vmem, size = 0x8000, scoped, tag = 'input window, operand 2, single buffered']
    #allocation3 [shape = 's32[1]{0}', space=sflag, size = 0x4, scoped, tag = 'scoped memory for tpu_custom_call.1']
    #allocation4 [shape = 's32[1]{0}', space=sflag, size = 0x4, scoped, tag = 'scoped memory for tpu_custom_call.1']
    #allocation5 [shape = 'u8[4096]{0}', space=vmem, size = 0x1000, scoped, tag = 'output window, operand 0, single buffered']
    %9 = vsyncpa [#allocation3], 0
    %10 = vsyncpa [#allocation4], 0
    // Predicated region
    $region2: #{tpu_custom_call.1} parent=1 // pred_check
      _
    $region3: #{tpu_custom_call.1} parent=1 // pred_check_branch
      %12 = sbr.rel (0) target = $region5
    $region4: #{tpu_custom_call.1} parent=1 // pred_region
      _
    $region5: #{tpu_custom_call.1} parent=1 // pred_fallthru
      _
    // Predicated region
    $region6: #{tpu_custom_call.1} parent=1 // pred_check
      _
    $region7: #{tpu_custom_call.1} parent=1 // pred_check_branch
      %14 = sbr.rel (0) target = $region9
    $region8: #{tpu_custom_call.1} parent=1 // pred_region
      _
    $region9: #{tpu_custom_call.1} parent=1 // pred_fallthru
      _
    // Predicated region
    $region10: #{tpu_custom_call.1} parent=1 // pred_check
      _
    $region11: #{tpu_custom_call.1} parent=1 // pred_check_branch
      %16 = sbr.rel (0) target = $region13
    $region12: #{tpu_custom_call.1} parent=1 // pred_region
      %18 = vsyncadd [#allocation3], 0
      %s19 = sshll.u32 %s2, 4
      %s20 = int_to_ptr.hbm [resolvable:$true] %s19
      %s21 = sshll.u32 [#allocation2], 4
      %s22 = int_to_ptr.vmem [resolvable:$true] %s21
      %27 = dma.hbm_to_vmem [thread:$0]  %s20, 1024, %s22, [#allocation3], 128, 128, 8
    $region13: #{tpu_custom_call.1} parent=1 // pred_fallthru
      _
    // Predicated region
    $region14: #{tpu_custom_call.1} parent=1 // pred_check
      _
    $region15: #{tpu_custom_call.1} parent=1 // pred_check_branch
      %29 = sbr.rel (0) target = $region17
    $region16: #{tpu_custom_call.1} parent=1 // pred_region
      _
    $region17: #{tpu_custom_call.1} parent=1 // pred_fallthru
      _
    // Predicated region
    $region18: #{tpu_custom_call.1} parent=1 // pred_check
      _
    $region19: #{tpu_custom_call.1} parent=1 // pred_check_branch
      %31 = sbr.rel (0) target = $region21
    $region20: #{tpu_custom_call.1} parent=1 // pred_region
      %33 = dma.done [#allocation3], 1024
    $region21: #{tpu_custom_call.1} parent=1 // pred_fallthru
      _
    %v35 = vld [vmem:[%s0] sm:$0xf]
    %v36 = vld [vmem:[%s0 + $0x4] sm:$0xf]
    %v37 = vld [vmem:[%s0 + $0x8] sm:$0xf]
    %v38 = vld [vmem:[%s0 + $0xc] sm:$0xf]
    %v39 = vld [vmem:[%s0 + $0x10] sm:$0xf]
    %v40 = vld [vmem:[%s0 + $0x14] sm:$0xf]
    %v41 = vld [vmem:[%s0 + $0x18] sm:$0xf]
    %v42 = vld [vmem:[%s0 + $0x1c] sm:$0xf]
    %v43 = vld [vmem:[%s1] sm:$0xff]
    %v44 = vld [vmem:[%s1 + $0x8] sm:$0xff]
    %v45 = vld [vmem:[%s1 + $0x10] sm:$0xff]
    %v46 = vld [vmem:[%s1 + $0x18] sm:$0xff]
    %v47 = vld [vmem:[%s3] sm:$0x3]
    %v49 = vperm.slane %v47, 0
    %v50 = vperm.slane %v47, 1
    %v61 = vunpack.c.l.b16 %v35
    %v62 = vunpack.c.l.b16 %v36
    %v63 = vunpack.c.l.b16 %v37
    %v64 = vunpack.c.l.b16 %v38
    %v65 = vunpack.c.l.b16 %v39
    %v66 = vunpack.c.l.b16 %v40
    %v67 = vunpack.c.l.b16 %v41
    %v68 = vunpack.c.l.b16 %v42
    %v69 = vpack.c.b16 %v62, %v61
    %v70 = vpack.c.b16 %v64, %v63
    %v71 = vpack.c.b16 %v66, %v65
    %v72 = vpack.c.b16 %v68, %v67
    %v77 = vunpack.c.l.b16 %v43
    %v78 = vunpack.c.h.b16 %v43
    %v79 = vunpack.c.l.b16 %v44
    %v80 = vunpack.c.h.b16 %v44
    %v81 = vunpack.c.l.b16 %v45
    %v82 = vunpack.c.h.b16 %v45
    %v83 = vunpack.c.l.b16 %v46
    %v84 = vunpack.c.h.b16 %v46
    %v85 = vpack.c.b16 %v79, %v77
    %v86 = vpack.c.b16 %v80, %v78
    %v87 = vpack.c.b16 %v83, %v81
    %v88 = vpack.c.b16 %v84, %v82
    %vm93 = vcmask 261120
    %v95 = vsel %vm93, %v69, 0
    %v98 = vsel %vm93, %v70, 0
    %v101 = vsel %vm93, %v71, 0
    %v104 = vsel %vm93, %v72, 0
    %106 = vmatpush.bf16.msra.mxu0 0
    %107 = vmatpush.bf16.msra.mxu0 0
    %108 = vmatpush.bf16.msra.mxu0 0
    %109 = vmatpush.bf16.msra.mxu0 0
    %110 = vmatpush.bf16.msra.mxu0 0
    %111 = vmatpush.bf16.msra.mxu0 0
    %112 = vmatpush.bf16.msra.mxu0 %v87
    %113 = vmatpush.bf16.msra.mxu0 %v85
    %114 = vmatmul.bf16.gmra.mxu0 %v95
    %v115 = vpop.f32.mrf.mxu0
    %v116 = vadd.f32 %v49, %v115
    %v117 = vpop.f32.mrf.mxu0
    %v118 = vadd.f32 %v49, %v117
    %119 = vmatmul.bf16.gmra.mxu0 %v98
    %v120 = vpop.f32.mrf.mxu0
    %v121 = vadd.f32 %v49, %v120
    %v122 = vpop.f32.mrf.mxu0
    %v123 = vadd.f32 %v49, %v122
    %124 = vmatmul.bf16.gmra.mxu0 %v101
    %v125 = vpop.f32.mrf.mxu0
    %v126 = vadd.f32 %v49, %v125
    %v127 = vpop.f32.mrf.mxu0
    %v128 = vadd.f32 %v49, %v127
    %129 = vmatmul.bf16.gmra.mxu0 %v104
    %v130 = vpop.f32.mrf.mxu0
    %v131 = vadd.f32 %v49, %v130
    %v132 = vpop.f32.mrf.mxu0
    %v133 = vadd.f32 %v49, %v132
    %134 = vdwg.mxu0
    %135 = vmatpush.bf16.msra.mxu0 0
    %136 = vmatpush.bf16.msra.mxu0 0
    %137 = vmatpush.bf16.msra.mxu0 0
    %138 = vmatpush.bf16.msra.mxu0 0
    %139 = vmatpush.bf16.msra.mxu0 0
    %140 = vmatpush.bf16.msra.mxu0 0
    %141 = vmatpush.bf16.msra.mxu0 %v88
    %142 = vmatpush.bf16.msra.mxu0 %v86
    %143 = vmatmul.bf16.gmra.mxu0 %v95
    %v144 = vpop.f32.mrf.mxu0
    %v145 = vadd.f32 %v50, %v144
    %v146 = vpop.f32.mrf.mxu0
    %v147 = vadd.f32 %v50, %v146
    %148 = vmatmul.bf16.gmra.mxu0 %v98
    %v149 = vpop.f32.mrf.mxu0
    %v150 = vadd.f32 %v50, %v149
    %v151 = vpop.f32.mrf.mxu0
    %v152 = vadd.f32 %v50, %v151
    %153 = vmatmul.bf16.gmra.mxu0 %v101
    %v154 = vpop.f32.mrf.mxu0
    %v155 = vadd.f32 %v50, %v154
    %v156 = vpop.f32.mrf.mxu0
    %v157 = vadd.f32 %v50, %v156
    %158 = vmatmul.bf16.gmra.mxu0 %v104
    %v159 = vpop.f32.mrf.mxu0
    %v160 = vadd.f32 %v50, %v159
    %v161 = vpop.f32.mrf.mxu0
    %v162 = vadd.f32 %v50, %v161
    %163 = vdwg.mxu0
    %v164 = vld [vmem:[#allocation2] sm:$0xff]
    %v165 = vld [vmem:[#allocation2 + $0x8] sm:$0xff]
    %v166 = vld [vmem:[#allocation2 + $0x10] sm:$0xff]
    %v167 = vld [vmem:[#allocation2 + $0x18] sm:$0xff]
    %v168 = vld [vmem:[#allocation2 + $0x20] sm:$0xff]
    %v169 = vld [vmem:[#allocation2 + $0x28] sm:$0xff]
    %v170 = vld [vmem:[#allocation2 + $0x30] sm:$0xff]
    %v171 = vld [vmem:[#allocation2 + $0x38] sm:$0xff]
    %v180 = vunpack.c.l.b16 %v164
    %v181 = vunpack.c.h.b16 %v164
    %v182 = vunpack.c.l.b16 %v165
    %v183 = vunpack.c.h.b16 %v165
    %v184 = vunpack.c.l.b16 %v166
    %v185 = vunpack.c.h.b16 %v166
    %v186 = vunpack.c.l.b16 %v167
    %v187 = vunpack.c.h.b16 %v167
    %v188 = vunpack.c.l.b16 %v168
    %v189 = vunpack.c.h.b16 %v168
    %v190 = vunpack.c.l.b16 %v169
    %v191 = vunpack.c.h.b16 %v169
    %v192 = vunpack.c.l.b16 %v170
    %v193 = vunpack.c.h.b16 %v170
    %v194 = vunpack.c.l.b16 %v171
    %v195 = vunpack.c.h.b16 %v171
    %v196 = vpack.c.b16 %v182, %v180
    %v197 = vpack.c.b16 %v183, %v181
    %v198 = vpack.c.b16 %v186, %v184
    %v199 = vpack.c.b16 %v187, %v185
    %v200 = vpack.c.b16 %v190, %v188
    %v201 = vpack.c.b16 %v191, %v189
    %v202 = vpack.c.b16 %v194, %v192
    %v203 = vpack.c.b16 %v195, %v193
    %vm212 = vcmask 523264
    %v214 = vsel %vm212, 0, 0
    %216 = vmatpush.bf16.msra.mxu0 0
    %217 = vmatpush.bf16.msra.mxu0 0
    %218 = vmatpush.bf16.msra.mxu0 0
    %219 = vmatpush.bf16.msra.mxu0 0
    %220 = vmatpush.bf16.msra.mxu0 %v202
    %221 = vmatpush.bf16.msra.mxu0 %v200
    %222 = vmatpush.bf16.msra.mxu0 %v198
    %223 = vmatpush.bf16.msra.mxu0 %v196
    %224 = vmatmul.bf16.gmra.mxu0 %v214
    %v225 = vpop.f32.mrf.mxu0
    %v226 = vadd.f32 0.0, %v225
    %v227 = vpop.f32.mrf.mxu0
    %228 = vdwg.mxu0
    %229 = vmatpush.bf16.msra.mxu0 0
    %230 = vmatpush.bf16.msra.mxu0 0
    %231 = vmatpush.bf16.msra.mxu0 0
    %232 = vmatpush.bf16.msra.mxu0 0
    %233 = vmatpush.bf16.msra.mxu0 %v203
    %234 = vmatpush.bf16.msra.mxu0 %v201
    %235 = vmatpush.bf16.msra.mxu0 %v199
    %236 = vmatpush.bf16.msra.mxu0 %v197
    %237 = vmatmul.bf16.gmra.mxu0 %v214
    %v238 = vpop.f32.mrf.mxu0
    %v239 = vadd.f32 0.0, %v238
    %v240 = vpop.f32.mrf.mxu0
    %241 = vdwg.mxu0
    %v242 = vadd.f32 %v116, %v226
    %v243 = vadd.f32 %v145, %v239
    %v244 = vxor.u32 %v242, 2147483648
    %v245 = vmul.f32 %v244, 1.442695
    %v246 = vpow.pop %v245
    %v247 = vadd.f32 %v246, 1.0
    %v248 = vrcp.pop %v247
    %v249 = vmul.f32 %v247, %v248
    %v250 = vsub.f32 1.0, %v249
    %v251 = vmul.f32 %v248, %v250
    %v252 = vadd.f32 %v248, %v251
    %vm253 = vweird.f32 %v247
    %vm254 = vweird.f32 %v248
    %vm255 = vmor %vm253, %vm254
    %v256 = vsel %vm255, %v248, %v252
    %v257 = vand.u32 2147483647, %v247
    %vm258 = vcmp.eq.f32.partialorder %v257, 8.507059e+37
    %v259 = vand.u32 %v247, 2147483648
    %v260 = vor.u32 1.1754944e-38, %v259
    %v261 = vsel %vm258, %v260, %v256
    %v262 = vmul.f32 1.0, %v261
    %v263 = vtanh.pop %v243
    %v264 = vxor.u32 %v243, 2147483648
    %v265 = vmul.f32 %v264, 1.442695
    %v266 = vpow.pop %v265
    %v267 = vadd.f32 %v266, 1.0
    %v268 = vrcp.pop %v267
    %v269 = vmul.f32 %v267, %v268
    %v270 = vsub.f32 1.0, %v269
    %v271 = vmul.f32 %v268, %v270
    %v272 = vadd.f32 %v268, %v271
    %vm273 = vweird.f32 %v267
    %vm274 = vweird.f32 %v268
    %vm275 = vmor %vm273, %vm274
    %v276 = vsel %vm275, %v268, %v272
    %v277 = vand.u32 2147483647, %v267
    %vm278 = vcmp.eq.f32.partialorder %v277, 8.507059e+37
    %v279 = vand.u32 %v267, 2147483648
    %v280 = vor.u32 1.1754944e-38, %v279
    %v281 = vsel %vm278, %v280, %v276
    %v282 = vmul.f32 1.0, %v281
    %v283 = vmul.f32 %v262, 0.0
    %v284 = vmul.f32 %v262, %v263
    %286 = vrot.lane.b32.xlu0 %v284, 64
    %v287 = vpop.permute.xlu0 %286
    %v289 = vadd.f32 %v283, %v287
    %v290 = vtanh.pop %v289
    %v291 = vmul.f32 %v282, %v290
    %293 = vrot.lane.b32.xlu0 %v291, 64
    %v294 = vpop.permute.xlu0 %293
    %vm296 = vcmask 523520
    %297 = vst.msk [vmem:[#allocation5] sm:$0xff] %vm296, %v294
    %v298 = vpack.c.bf16 %v291, %v291
    %300 = vrot.lane.b32.xlu0 %v298, 64
    %v301 = vpop.permute.xlu0 %300
    %v303 = vsel %vm212, %v301, 0
    %305 = vmatpush.bf16.msra.mxu0 0
    %306 = vmatpush.bf16.msra.mxu0 0
    %307 = vmatpush.bf16.msra.mxu0 0
    %308 = vmatpush.bf16.msra.mxu0 0
    %309 = vmatpush.bf16.msra.mxu0 %v202
    %310 = vmatpush.bf16.msra.mxu0 %v200
    %311 = vmatpush.bf16.msra.mxu0 %v198
    %312 = vmatpush.bf16.msra.mxu0 %v196
    %313 = vmatmul.bf16.gmra.mxu0 %v303
    %v314 = vpop.f32.mrf.mxu0
    %v315 = vadd.f32 0.0, %v314
    %v316 = vpop.f32.mrf.mxu0
    %317 = vdwg.mxu0
    %318 = vmatpush.bf16.msra.mxu0 0
    %319 = vmatpush.bf16.msra.mxu0 0
    %320 = vmatpush.bf16.msra.mxu0 0
    %321 = vmatpush.bf16.msra.mxu0 0
    %322 = vmatpush.bf16.msra.mxu0 %v203
    %323 = vmatpush.bf16.msra.mxu0 %v201
    %324 = vmatpush.bf16.msra.mxu0 %v199
    %325 = vmatpush.bf16.msra.mxu0 %v197
    %326 = vmatmul.bf16.gmra.mxu0 %v303
    %v327 = vpop.f32.mrf.mxu0
    %v328 = vadd.f32 0.0, %v327
    %v329 = vpop.f32.mrf.mxu0
    %330 = vdwg.mxu0
    %v331 = vadd.f32 %v118, %v315
    %v332 = vadd.f32 %v147, %v328
    %v333 = vxor.u32 %v331, 2147483648
    %v334 = vmul.f32 %v333, 1.442695
    %v335 = vpow.pop %v334
    %v336 = vadd.f32 %v335, 1.0
    %v337 = vrcp.pop %v336
    %v338 = vmul.f32 %v336, %v337
    %v339 = vsub.f32 1.0, %v338
    %v340 = vmul.f32 %v337, %v339
    %v341 = vadd.f32 %v337, %v340
    %vm342 = vweird.f32 %v336
    %vm343 = vweird.f32 %v337
    %vm344 = vmor %vm342, %vm343
    %v345 = vsel %vm344, %v337, %v341
    %v346 = vand.u32 2147483647, %v336
    %vm347 = vcmp.eq.f32.partialorder %v346, 8.507059e+37
    %v348 = vand.u32 %v336, 2147483648
    %v349 = vor.u32 1.1754944e-38, %v348
    %v350 = vsel %vm347, %v349, %v345
    %v351 = vmul.f32 1.0, %v350
    %v352 = vtanh.pop %v332
    %v353 = vxor.u32 %v332, 2147483648
    %v354 = vmul.f32 %v353, 1.442695
    %v355 = vpow.pop %v354
    %v356 = vadd.f32 %v355, 1.0
    %v357 = vrcp.pop %v356
    %v358 = vmul.f32 %v356, %v357
    %v359 = vsub.f32 1.0, %v358
    %v360 = vmul.f32 %v357, %v359
    %v361 = vadd.f32 %v357, %v360
    %vm362 = vweird.f32 %v356
    %vm363 = vweird.f32 %v357
    %vm364 = vmor %vm362, %vm363
    %v365 = vsel %vm364, %v357, %v361
    %v366 = vand.u32 2147483647, %v356
    %vm367 = vcmp.eq.f32.partialorder %v366, 8.507059e+37
    %v368 = vand.u32 %v356, 2147483648
    %v369 = vor.u32 1.1754944e-38, %v368
    %v370 = vsel %vm367, %v369, %v365
    %v371 = vmul.f32 1.0, %v370
    %v372 = vmul.f32 %v351, %v289
    %v373 = vmul.f32 %v351, %v352
    %375 = vrot.lane.b32.xlu0 %v373, 64
    %v376 = vpop.permute.xlu0 %375
    %v378 = vadd.f32 %v372, %v376
    %v379 = vtanh.pop %v378
    %v380 = vmul.f32 %v371, %v379
    %v381 = vpack.c.bf16 %v380, %v380
    %383 = vrot.lane.b32.xlu0 %v381, 64
    %v384 = vpop.permute.xlu0 %383
    %v386 = vsel %vm212, %v384, 0
    %388 = vmatpush.bf16.msra.mxu0 0
    %389 = vmatpush.bf16.msra.mxu0 0
    %390 = vmatpush.bf16.msra.mxu0 0
    %391 = vmatpush.bf16.msra.mxu0 0
    %392 = vmatpush.bf16.msra.mxu0 %v202
    %393 = vmatpush.bf16.msra.mxu0 %v200
    %394 = vmatpush.bf16.msra.mxu0 %v198
    %395 = vmatpush.bf16.msra.mxu0 %v196
    %396 = vmatmul.bf16.gmra.mxu0 %v386
    %v397 = vpop.f32.mrf.mxu0
    %v398 = vadd.f32 0.0, %v397
    %v399 = vpop.f32.mrf.mxu0
    %400 = vdwg.mxu0
    %401 = vmatpush.bf16.msra.mxu0 0
    %402 = vmatpush.bf16.msra.mxu0 0
    %403 = vmatpush.bf16.msra.mxu0 0
    %404 = vmatpush.bf16.msra.mxu0 0
    %405 = vmatpush.bf16.msra.mxu0 %v203
    %406 = vmatpush.bf16.msra.mxu0 %v201
    %407 = vmatpush.bf16.msra.mxu0 %v199
    %408 = vmatpush.bf16.msra.mxu0 %v197
    %409 = vmatmul.bf16.gmra.mxu0 %v386
    %v410 = vpop.f32.mrf.mxu0
    %v411 = vadd.f32 0.0, %v410
    %v412 = vpop.f32.mrf.mxu0
    %413 = vdwg.mxu0
    %v414 = vadd.f32 %v121, %v398
    %v415 = vadd.f32 %v150, %v411
    %v416 = vxor.u32 %v414, 2147483648
    %v417 = vmul.f32 %v416, 1.442695
    %v418 = vpow.pop %v417
    %v419 = vadd.f32 %v418, 1.0
    %v420 = vrcp.pop %v419
    %v421 = vmul.f32 %v419, %v420
    %v422 = vsub.f32 1.0, %v421
    %v423 = vmul.f32 %v420, %v422
    %v424 = vadd.f32 %v420, %v423
    %vm425 = vweird.f32 %v419
    %vm426 = vweird.f32 %v420
    %vm427 = vmor %vm425, %vm426
    %v428 = vsel %vm427, %v420, %v424
    %v429 = vand.u32 2147483647, %v419
    %vm430 = vcmp.eq.f32.partialorder %v429, 8.507059e+37
    %v431 = vand.u32 %v419, 2147483648
    %v432 = vor.u32 1.1754944e-38, %v431
    %v433 = vsel %vm430, %v432, %v428
    %v434 = vmul.f32 1.0, %v433
    %v435 = vtanh.pop %v415
    %v436 = vxor.u32 %v415, 2147483648
    %v437 = vmul.f32 %v436, 1.442695
    %v438 = vpow.pop %v437
    %v439 = vadd.f32 %v438, 1.0
    %v440 = vrcp.pop %v439
    %v441 = vmul.f32 %v439, %v440
    %v442 = vsub.f32 1.0, %v441
    %v443 = vmul.f32 %v440, %v442
    %v444 = vadd.f32 %v440, %v443
    %vm445 = vweird.f32 %v439
    %vm446 = vweird.f32 %v440
    %vm447 = vmor %vm445, %vm446
    %v448 = vsel %vm447, %v440, %v444
    %v449 = vand.u32 2147483647, %v439
    %vm450 = vcmp.eq.f32.partialorder %v449, 8.507059e+37
    %v451 = vand.u32 %v439, 2147483648
    %v452 = vor.u32 1.1754944e-38, %v451
    %v453 = vsel %vm450, %v452, %v448
    %v454 = vmul.f32 1.0, %v453
    %v455 = vmul.f32 %v434, %v378
    %v456 = vmul.f32 %v434, %v435
    %458 = vrot.lane.b32.xlu0 %v456, 64
    %v459 = vpop.permute.xlu0 %458
    %v461 = vadd.f32 %v455, %v459
    %v462 = vtanh.pop %v461
    %v463 = vmul.f32 %v454, %v462
    %v464 = vpack.c.bf16 %v463, %v463
    %466 = vrot.lane.b32.xlu0 %v464, 64
    %v467 = vpop.permute.xlu0 %466
    %v469 = vsel %vm212, %v467, 0
    %471 = vmatpush.bf16.msra.mxu0 0
    %472 = vmatpush.bf16.msra.mxu0 0
    %473 = vmatpush.bf16.msra.mxu0 0
    %474 = vmatpush.bf16.msra.mxu0 0
    %475 = vmatpush.bf16.msra.mxu0 %v202
    %476 = vmatpush.bf16.msra.mxu0 %v200
    %477 = vmatpush.bf16.msra.mxu0 %v198
    %478 = vmatpush.bf16.msra.mxu0 %v196
    %479 = vmatmul.bf16.gmra.mxu0 %v469
    %v480 = vpop.f32.mrf.mxu0
    %v481 = vadd.f32 0.0, %v480
    %v482 = vpop.f32.mrf.mxu0
    %483 = vdwg.mxu0
    %484 = vmatpush.bf16.msra.mxu0 0
    %485 = vmatpush.bf16.msra.mxu0 0
    %486 = vmatpush.bf16.msra.mxu0 0
    %487 = vmatpush.bf16.msra.mxu0 0
    %488 = vmatpush.bf16.msra.mxu0 %v203
    %489 = vmatpush.bf16.msra.mxu0 %v201
    %490 = vmatpush.bf16.msra.mxu0 %v199
    %491 = vmatpush.bf16.msra.mxu0 %v197
    %492 = vmatmul.bf16.gmra.mxu0 %v469
    %v493 = vpop.f32.mrf.mxu0
    %v494 = vadd.f32 0.0, %v493
    %v495 = vpop.f32.mrf.mxu0
    %496 = vdwg.mxu0
    %v497 = vadd.f32 %v123, %v481
    %v498 = vadd.f32 %v152, %v494
    %v499 = vxor.u32 %v497, 2147483648
    %v500 = vmul.f32 %v499, 1.442695
    %v501 = vpow.pop %v500
    %v502 = vadd.f32 %v501, 1.0
    %v503 = vrcp.pop %v502
    %v504 = vmul.f32 %v502, %v503
    %v505 = vsub.f32 1.0, %v504
    %v506 = vmul.f32 %v503, %v505
    %v507 = vadd.f32 %v503, %v506
    %vm508 = vweird.f32 %v502
    %vm509 = vweird.f32 %v503
    %vm510 = vmor %vm508, %vm509
    %v511 = vsel %vm510, %v503, %v507
    %v512 = vand.u32 2147483647, %v502
    %vm513 = vcmp.eq.f32.partialorder %v512, 8.507059e+37
    %v514 = vand.u32 %v502, 2147483648
    %v515 = vor.u32 1.1754944e-38, %v514
    %v516 = vsel %vm513, %v515, %v511
    %v517 = vmul.f32 1.0, %v516
    %v518 = vtanh.pop %v498
    %v519 = vxor.u32 %v498, 2147483648
    %v520 = vmul.f32 %v519, 1.442695
    %v521 = vpow.pop %v520
    %v522 = vadd.f32 %v521, 1.0
    %v523 = vrcp.pop %v522
    %v524 = vmul.f32 %v522, %v523
    %v525 = vsub.f32 1.0, %v524
    %v526 = vmul.f32 %v523, %v525
    %v527 = vadd.f32 %v523, %v526
    %vm528 = vweird.f32 %v522
    %vm529 = vweird.f32 %v523
    %vm530 = vmor %vm528, %vm529
    %v531 = vsel %vm530, %v523, %v527
    %v532 = vand.u32 2147483647, %v522
    %vm533 = vcmp.eq.f32.partialorder %v532, 8.507059e+37
    %v534 = vand.u32 %v522, 2147483648
    %v535 = vor.u32 1.1754944e-38, %v534
    %v536 = vsel %vm533, %v535, %v531
    %v537 = vmul.f32 1.0, %v536
    %v538 = vmul.f32 %v517, %v461
    %v539 = vmul.f32 %v517, %v518
    %541 = vrot.lane.b32.xlu0 %v539, 64
    %v542 = vpop.permute.xlu0 %541
    %v544 = vadd.f32 %v538, %v542
    %v545 = vtanh.pop %v544
    %v546 = vmul.f32 %v537, %v545
    %v547 = vpack.c.bf16 %v546, %v546
    %549 = vrot.lane.b32.xlu0 %v547, 64
    %v550 = vpop.permute.xlu0 %549
    %v552 = vsel %vm212, %v550, 0
    %554 = vmatpush.bf16.msra.mxu0 0
    %555 = vmatpush.bf16.msra.mxu0 0
    %556 = vmatpush.bf16.msra.mxu0 0
    %557 = vmatpush.bf16.msra.mxu0 0
    %558 = vmatpush.bf16.msra.mxu0 %v202
    %559 = vmatpush.bf16.msra.mxu0 %v200
    %560 = vmatpush.bf16.msra.mxu0 %v198
    %561 = vmatpush.bf16.msra.mxu0 %v196
    %562 = vmatmul.bf16.gmra.mxu0 %v552
    %v563 = vpop.f32.mrf.mxu0
    %v564 = vadd.f32 0.0, %v563
    %v565 = vpop.f32.mrf.mxu0
    %566 = vdwg.mxu0
    %567 = vmatpush.bf16.msra.mxu0 0
    %568 = vmatpush.bf16.msra.mxu0 0
    %569 = vmatpush.bf16.msra.mxu0 0
    %570 = vmatpush.bf16.msra.mxu0 0
    %571 = vmatpush.bf16.msra.mxu0 %v203
    %572 = vmatpush.bf16.msra.mxu0 %v201
    %573 = vmatpush.bf16.msra.mxu0 %v199
    %574 = vmatpush.bf16.msra.mxu0 %v197
    %575 = vmatmul.bf16.gmra.mxu0 %v552
    %v576 = vpop.f32.mrf.mxu0
    %v577 = vadd.f32 0.0, %v576
    %v578 = vpop.f32.mrf.mxu0
    %579 = vdwg.mxu0
    %v580 = vadd.f32 %v126, %v564
    %v581 = vadd.f32 %v155, %v577
    %v582 = vxor.u32 %v580, 2147483648
    %v583 = vmul.f32 %v582, 1.442695
    %v584 = vpow.pop %v583
    %v585 = vadd.f32 %v584, 1.0
    %v586 = vrcp.pop %v585
    %v587 = vmul.f32 %v585, %v586
    %v588 = vsub.f32 1.0, %v587
    %v589 = vmul.f32 %v586, %v588
    %v590 = vadd.f32 %v586, %v589
    %vm591 = vweird.f32 %v585
    %vm592 = vweird.f32 %v586
    %vm593 = vmor %vm591, %vm592
    %v594 = vsel %vm593, %v586, %v590
    %v595 = vand.u32 2147483647, %v585
    %vm596 = vcmp.eq.f32.partialorder %v595, 8.507059e+37
    %v597 = vand.u32 %v585, 2147483648
    %v598 = vor.u32 1.1754944e-38, %v597
    %v599 = vsel %vm596, %v598, %v594
    %v600 = vmul.f32 1.0, %v599
    %v601 = vtanh.pop %v581
    %v602 = vxor.u32 %v581, 2147483648
    %v603 = vmul.f32 %v602, 1.442695
    %v604 = vpow.pop %v603
    %v605 = vadd.f32 %v604, 1.0
    %v606 = vrcp.pop %v605
    %v607 = vmul.f32 %v605, %v606
    %v608 = vsub.f32 1.0, %v607
    %v609 = vmul.f32 %v606, %v608
    %v610 = vadd.f32 %v606, %v609
    %vm611 = vweird.f32 %v605
    %vm612 = vweird.f32 %v606
    %vm613 = vmor %vm611, %vm612
    %v614 = vsel %vm613, %v606, %v610
    %v615 = vand.u32 2147483647, %v605
    %vm616 = vcmp.eq.f32.partialorder %v615, 8.507059e+37
    %v617 = vand.u32 %v605, 2147483648
    %v618 = vor.u32 1.1754944e-38, %v617
    %v619 = vsel %vm616, %v618, %v614
    %v620 = vmul.f32 1.0, %v619
    %v621 = vmul.f32 %v600, %v544
    %v622 = vmul.f32 %v600, %v601
    %624 = vrot.lane.b32.xlu0 %v622, 64
    %v625 = vpop.permute.xlu0 %624
    %v627 = vadd.f32 %v621, %v625
    %v628 = vtanh.pop %v627
    %v629 = vmul.f32 %v620, %v628
    %v630 = vpack.c.bf16 %v629, %v629
    %632 = vrot.lane.b32.xlu0 %v630, 64
    %v633 = vpop.permute.xlu0 %632
    %v635 = vsel %vm212, %v633, 0
    %637 = vmatpush.bf16.msra.mxu0 0
    %638 = vmatpush.bf16.msra.mxu0 0
    %639 = vmatpush.bf16.msra.mxu0 0
    %640 = vmatpush.bf16.msra.mxu0 0
    %641 = vmatpush.bf16.msra.mxu0 %v202
    %642 = vmatpush.bf16.msra.mxu0 %v200
    %643 = vmatpush.bf16.msra.mxu0 %v198
    %644 = vmatpush.bf16.msra.mxu0 %v196
    %645 = vmatmul.bf16.gmra.mxu0 %v635
    %v646 = vpop.f32.mrf.mxu0
    %v647 = vadd.f32 0.0, %v646
    %v648 = vpop.f32.mrf.mxu0
    %649 = vdwg.mxu0
    %650 = vmatpush.bf16.msra.mxu0 0
    %651 = vmatpush.bf16.msra.mxu0 0
    %652 = vmatpush.bf16.msra.mxu0 0
    %653 = vmatpush.bf16.msra.mxu0 0
    %654 = vmatpush.bf16.msra.mxu0 %v203
    %655 = vmatpush.bf16.msra.mxu0 %v201
    %656 = vmatpush.bf16.msra.mxu0 %v199
    %657 = vmatpush.bf16.msra.mxu0 %v197
    %658 = vmatmul.bf16.gmra.mxu0 %v635
    %v659 = vpop.f32.mrf.mxu0
    %v660 = vadd.f32 0.0, %v659
    %v661 = vpop.f32.mrf.mxu0
    %662 = vdwg.mxu0
    %v663 = vadd.f32 %v128, %v647
    %v664 = vadd.f32 %v157, %v660
    %v665 = vxor.u32 %v663, 2147483648
    %v666 = vmul.f32 %v665, 1.442695
    %v667 = vpow.pop %v666
    %v668 = vadd.f32 %v667, 1.0
    %v669 = vrcp.pop %v668
    %v670 = vmul.f32 %v668, %v669
    %v671 = vsub.f32 1.0, %v670
    %v672 = vmul.f32 %v669, %v671
    %v673 = vadd.f32 %v669, %v672
    %vm674 = vweird.f32 %v668
    %vm675 = vweird.f32 %v669
    %vm676 = vmor %vm674, %vm675
    %v677 = vsel %vm676, %v669, %v673
    %v678 = vand.u32 2147483647, %v668
    %vm679 = vcmp.eq.f32.partialorder %v678, 8.507059e+37
    %v680 = vand.u32 %v668, 2147483648
    %v681 = vor.u32 1.1754944e-38, %v680
    %v682 = vsel %vm679, %v681, %v677
    %v683 = vmul.f32 1.0, %v682
    %v684 = vtanh.pop %v664
    %v685 = vxor.u32 %v664, 2147483648
    %v686 = vmul.f32 %v685, 1.442695
    %v687 = vpow.pop %v686
    %v688 = vadd.f32 %v687, 1.0
    %v689 = vrcp.pop %v688
    %v690 = vmul.f32 %v688, %v689
    %v691 = vsub.f32 1.0, %v690
    %v692 = vmul.f32 %v689, %v691
    %v693 = vadd.f32 %v689, %v692
    %vm694 = vweird.f32 %v688
    %vm695 = vweird.f32 %v689
    %vm696 = vmor %vm694, %vm695
    %v697 = vsel %vm696, %v689, %v693
    %v698 = vand.u32 2147483647, %v688
    %vm699 = vcmp.eq.f32.partialorder %v698, 8.507059e+37
    %v700 = vand.u32 %v688, 2147483648
    %v701 = vor.u32 1.1754944e-38, %v700
    %v702 = vsel %vm699, %v701, %v697
    %v703 = vmul.f32 1.0, %v702
    %v704 = vmul.f32 %v683, %v627
    %v705 = vmul.f32 %v683, %v684
    %707 = vrot.lane.b32.xlu0 %v705, 64
    %v708 = vpop.permute.xlu0 %707
    %v710 = vadd.f32 %v704, %v708
    %v711 = vtanh.pop %v710
    %v712 = vmul.f32 %v703, %v711
    %v713 = vpack.c.bf16 %v712, %v712
    %715 = vrot.lane.b32.xlu0 %v713, 64
    %v716 = vpop.permute.xlu0 %715
    %v718 = vsel %vm212, %v716, 0
    %720 = vmatpush.bf16.msra.mxu0 0
    %721 = vmatpush.bf16.msra.mxu0 0
    %722 = vmatpush.bf16.msra.mxu0 0
    %723 = vmatpush.bf16.msra.mxu0 0
    %724 = vmatpush.bf16.msra.mxu0 %v202
    %725 = vmatpush.bf16.msra.mxu0 %v200
    %726 = vmatpush.bf16.msra.mxu0 %v198
    %727 = vmatpush.bf16.msra.mxu0 %v196
    %728 = vmatmul.bf16.gmra.mxu0 %v718
    %v729 = vpop.f32.mrf.mxu0
    %v730 = vadd.f32 0.0, %v729
    %v731 = vpop.f32.mrf.mxu0
    %732 = vdwg.mxu0
    %733 = vmatpush.bf16.msra.mxu0 0
    %734 = vmatpush.bf16.msra.mxu0 0
    %735 = vmatpush.bf16.msra.mxu0 0
    %736 = vmatpush.bf16.msra.mxu0 0
    %737 = vmatpush.bf16.msra.mxu0 %v203
    %738 = vmatpush.bf16.msra.mxu0 %v201
    %739 = vmatpush.bf16.msra.mxu0 %v199
    %740 = vmatpush.bf16.msra.mxu0 %v197
    %741 = vmatmul.bf16.gmra.mxu0 %v718
    %v742 = vpop.f32.mrf.mxu0
    %v743 = vadd.f32 0.0, %v742
    %v744 = vpop.f32.mrf.mxu0
    %745 = vdwg.mxu0
    %v746 = vadd.f32 %v131, %v730
    %v747 = vadd.f32 %v160, %v743
    %v748 = vxor.u32 %v746, 2147483648
    %v749 = vmul.f32 %v748, 1.442695
    %v750 = vpow.pop %v749
    %v751 = vadd.f32 %v750, 1.0
    %v752 = vrcp.pop %v751
    %v753 = vmul.f32 %v751, %v752
    %v754 = vsub.f32 1.0, %v753
    %v755 = vmul.f32 %v752, %v754
    %v756 = vadd.f32 %v752, %v755
    %vm757 = vweird.f32 %v751
    %vm758 = vweird.f32 %v752
    %vm759 = vmor %vm757, %vm758
    %v760 = vsel %vm759, %v752, %v756
    %v761 = vand.u32 2147483647, %v751
    %vm762 = vcmp.eq.f32.partialorder %v761, 8.507059e+37
    %v763 = vand.u32 %v751, 2147483648
    %v764 = vor.u32 1.1754944e-38, %v763
    %v765 = vsel %vm762, %v764, %v760
    %v766 = vmul.f32 1.0, %v765
    %v767 = vtanh.pop %v747
    %v768 = vxor.u32 %v747, 2147483648
    %v769 = vmul.f32 %v768, 1.442695
    %v770 = vpow.pop %v769
    %v771 = vadd.f32 %v770, 1.0
    %v772 = vrcp.pop %v771
    %v773 = vmul.f32 %v771, %v772
    %v774 = vsub.f32 1.0, %v773
    %v775 = vmul.f32 %v772, %v774
    %v776 = vadd.f32 %v772, %v775
    %vm777 = vweird.f32 %v771
    %vm778 = vweird.f32 %v772
    %vm779 = vmor %vm777, %vm778
    %v780 = vsel %vm779, %v772, %v776
    %v781 = vand.u32 2147483647, %v771
    %vm782 = vcmp.eq.f32.partialorder %v781, 8.507059e+37
    %v783 = vand.u32 %v771, 2147483648
    %v784 = vor.u32 1.1754944e-38, %v783
    %v785 = vsel %vm782, %v784, %v780
    %v786 = vmul.f32 1.0, %v785
    %v787 = vmul.f32 %v766, %v710
    %v788 = vmul.f32 %v766, %v767
    %790 = vrot.lane.b32.xlu0 %v788, 64
    %v791 = vpop.permute.xlu0 %790
    %v793 = vadd.f32 %v787, %v791
    %v794 = vtanh.pop %v793
    %v795 = vmul.f32 %v786, %v794
    %v796 = vpack.c.bf16 %v795, %v795
    %798 = vrot.lane.b32.xlu0 %v796, 64
    %v799 = vpop.permute.xlu0 %798
    %v801 = vsel %vm212, %v799, 0
    %803 = vmatpush.bf16.msra.mxu0 0
    %804 = vmatpush.bf16.msra.mxu0 0
    %805 = vmatpush.bf16.msra.mxu0 0
    %806 = vmatpush.bf16.msra.mxu0 0
    %807 = vmatpush.bf16.msra.mxu0 %v202
    %808 = vmatpush.bf16.msra.mxu0 %v200
    %809 = vmatpush.bf16.msra.mxu0 %v198
    %810 = vmatpush.bf16.msra.mxu0 %v196
    %811 = vmatmul.bf16.gmra.mxu0 %v801
    %v812 = vpop.f32.mrf.mxu0
    %v813 = vadd.f32 0.0, %v812
    %v814 = vpop.f32.mrf.mxu0
    %815 = vdwg.mxu0
    %816 = vmatpush.bf16.msra.mxu0 0
    %817 = vmatpush.bf16.msra.mxu0 0
    %818 = vmatpush.bf16.msra.mxu0 0
    %819 = vmatpush.bf16.msra.mxu0 0
    %820 = vmatpush.bf16.msra.mxu0 %v203
    %821 = vmatpush.bf16.msra.mxu0 %v201
    %822 = vmatpush.bf16.msra.mxu0 %v199
    %823 = vmatpush.bf16.msra.mxu0 %v197
    %824 = vmatmul.bf16.gmra.mxu0 %v801
    %v825 = vpop.f32.mrf.mxu0
    %v826 = vadd.f32 0.0, %v825
    %v827 = vpop.f32.mrf.mxu0
    %828 = vdwg.mxu0
    %v829 = vadd.f32 %v133, %v813
    %v830 = vadd.f32 %v162, %v826
    %v831 = vxor.u32 %v829, 2147483648
    %v832 = vmul.f32 %v831, 1.442695
    %v833 = vpow.pop %v832
    %v834 = vadd.f32 %v833, 1.0
    %v835 = vrcp.pop %v834
    %v836 = vmul.f32 %v834, %v835
    %v837 = vsub.f32 1.0, %v836
    %v838 = vmul.f32 %v835, %v837
    %v839 = vadd.f32 %v835, %v838
    %vm840 = vweird.f32 %v834
    %vm841 = vweird.f32 %v835
    %vm842 = vmor %vm840, %vm841
    %v843 = vsel %vm842, %v835, %v839
    %v844 = vand.u32 2147483647, %v834
    %vm845 = vcmp.eq.f32.partialorder %v844, 8.507059e+37
    %v846 = vand.u32 %v834, 2147483648
    %v847 = vor.u32 1.1754944e-38, %v846
    %v848 = vsel %vm845, %v847, %v843
    %v849 = vmul.f32 1.0, %v848
    %v850 = vtanh.pop %v830
    %v851 = vxor.u32 %v830, 2147483648
    %v852 = vmul.f32 %v851, 1.442695
    %v853 = vpow.pop %v852
    %v854 = vadd.f32 %v853, 1.0
    %v855 = vrcp.pop %v854
    %v856 = vmul.f32 %v854, %v855
    %v857 = vsub.f32 1.0, %v856
    %v858 = vmul.f32 %v855, %v857
    %v859 = vadd.f32 %v855, %v858
    %vm860 = vweird.f32 %v854
    %vm861 = vweird.f32 %v855
    %vm862 = vmor %vm860, %vm861
    %v863 = vsel %vm862, %v855, %v859
    %v864 = vand.u32 2147483647, %v854
    %vm865 = vcmp.eq.f32.partialorder %v864, 8.507059e+37
    %v866 = vand.u32 %v854, 2147483648
    %v867 = vor.u32 1.1754944e-38, %v866
    %v868 = vsel %vm865, %v867, %v863
    %v869 = vmul.f32 1.0, %v868
    %v870 = vmul.f32 %v849, %v793
    %v871 = vmul.f32 %v849, %v850
    %873 = vrot.lane.b32.xlu0 %v871, 64
    %v874 = vpop.permute.xlu0 %873
    %v876 = vadd.f32 %v870, %v874
    %v877 = vtanh.pop %v876
    %v878 = vmul.f32 %v869, %v877
    %880 = vrot.lane.b32.xlu0 %v878, 64
    %v881 = vpop.permute.xlu0 %880
    %883 = vst.msk [vmem:[#allocation5] sm:$0xff] %vm93, %v881
    // Predicated region
    $region22: #{tpu_custom_call.1} parent=1 // pred_check
      _
    $region23: #{tpu_custom_call.1} parent=1 // pred_check_branch
      %885 = sbr.rel (0) target = $region25
    $region24: #{tpu_custom_call.1} parent=1 // pred_region
      %887 = vsyncadd [#allocation4], 0
      %s889 = sshll.u32 [#allocation5], 4
      %s890 = int_to_ptr.vmem [resolvable:$true] %s889
      %s891 = sshll.u32 %s4, 4
      %s892 = int_to_ptr.hbm [resolvable:$true] %s891
      %894 = dma.vmem_to_hbm [thread:$0]  %s890, 128, %s892, [#allocation4]
    $region25: #{tpu_custom_call.1} parent=1 // pred_fallthru
      _
    // Predicated region
    $region26: #{tpu_custom_call.1} parent=1 // pred_check
      _
    $region27: #{tpu_custom_call.1} parent=1 // pred_check_branch
      %896 = sbr.rel (0) target = $region29
    $region28: #{tpu_custom_call.1} parent=1 // pred_region
      %898 = dma.done [#allocation4], 128
    $region29: #{tpu_custom_call.1} parent=1 // pred_fallthru
      _
    %899 = vsyncpa [#allocation3], 1
    %900 = vsyncpa [#allocation4], 1

</llo_original>
